<compile_context>
chip_gen: v5e
topology: v5e:2x2
jax: 0.10.0
libtpu: 0.0.40
codegen_flags: <defaults>
</compile_context>

<pallas_src>
import functools

import jax
import jax.numpy as jnp
from jax.experimental import pallas as pl
from jax.experimental.pallas import tpu as pltpu


def attention_kernel(x_ref, w1_ref, b1_ref, w2t_ref, out_ref, score_ref,
                     *, t_valid, t_chunk):
    # x_ref:     (TB, Tp, D)  block of TB batch elements (native dtype)
    # w1_ref:    (D, H)
    # b1_ref:    (1, H)
    # w2t_ref:   (1, H)       (W2 (H,1) transposed to a row)
    # out_ref:   (TB, D)      dense store
    # score_ref: (TB, Tp)     dense store, T on lanes
    TB, T, D = x_ref.shape
    H = w1_ref.shape[1]

    x = x_ref[...]                                             # native dtype

    # Linear(D -> H) + Tanh: one fused MXU matmul over all TB*T rows,
    # f32 accumulation.
    h = jnp.dot(x.reshape(TB * T, D), w1_ref[...],
                preferred_element_type=jnp.float32)            # (TB*T, H)
    h = jnp.tanh(h + b1_ref[...].astype(jnp.float32))

    # Linear(H -> 1, no bias): VPU multiply + lane reduce -> lane-major logits.
    s = jnp.sum(h.reshape(TB, T, H) * w2t_ref[...].astype(jnp.float32),
                axis=-1)                                       # (TB, T)

    # Mask padded sequence positions (static no-op when T == t_valid).
    if t_valid < T:
        lane = jax.lax.broadcasted_iota(jnp.int32, (TB, T), 1)
        s = jnp.where(lane < t_valid, s, -jnp.inf)

    # Softmax over the sequence axis (torch dim=1); exact reciprocal so each
    # score row sums to 1 (approx EUP reciprocal broke the reference check).
    m = jnp.max(s, axis=-1, keepdims=True)                     # (TB, 1)
    e = jnp.exp(s - m)                                         # (TB, T)
    p = e / jnp.sum(e, axis=-1, keepdims=True)                 # (TB, T) f32

    score_ref[...] = p.astype(score_ref.dtype)                 # dense (TB, T)

    # Weighted sum over T: out[b, d] = sum_t p[b, t] * x[b, t, d].
    # Chunked over T into a (TB, D) f32 accumulator to avoid materializing a
    # full (TB, T, D) f32 broadcast temp at large T. Kept on the VPU (an MXU
    # dot with M=1 per batch would waste the systolic array).
    acc = jnp.zeros((TB, D), jnp.float32)
    for c0 in range(0, T, t_chunk):
        c1 = min(c0 + t_chunk, T)
        xc = x[:, c0:c1, :].astype(jnp.float32)                # (TB, tc, D)
        pc = p[:, c0:c1]                                       # (TB, tc)
        acc = acc + jnp.sum(pc[:, :, None] * xc, axis=1)
    out_ref[...] = acc.astype(out_ref.dtype)


def _round_up(v, m):
    return -(-v // m) * m


def _choose_tiles(B, T, D, itemsize, *, target_rows=1024,
                  vmem_budget_bytes=32 << 20, min_grid=2):
    """Pick (tb, T_pad, B_pad, nb).

    tb is a multiple of 8 (sublane-dense 2-D output blocks), sized so the
    fused matmul has ~target_rows rows per step and the double-buffered x
    block (plus headroom for f32 temporaries) stays under the VMEM budget.
    Awkward B is handled by padding instead of degrading to tiny divisors.
    """
    T_pad = _round_up(max(T, 1), 8)
    per_b = T_pad * D * itemsize                      # x-block bytes / batch elem
    tb_budget = max(1, vmem_budget_bytes // (8 * per_b))   # ~8x headroom (db + temps)
    tb_rows = max(1, target_rows // T_pad)
    tb = max(1, min(tb_budget, tb_rows))
    tb = _round_up(min(tb, max(B, 1)), 8)             # multiple of 8 sublanes
    B_pad = _round_up(B, tb)
    nb = B_pad // tb
    # Prefer >= min_grid steps (so v7x's 2 TCs + double buffering have work),
    # but never below 8 rows per block and never for tiny workloads.
    if nb < min_grid:
        tb2 = _round_up(-(-B // min_grid), 8)
        if 8 <= tb2 < tb:
            tb = tb2
            B_pad = _round_up(B, tb)
            nb = B_pad // tb
    return tb, T_pad, B_pad, nb


def attention_forward(x, w1, b1, w2, *, target_rows=1024,
                      vmem_budget_bytes=32 << 20):
    B, T, D = x.shape
    H = w1.shape[1]
    itemsize = jnp.dtype(x.dtype).itemsize

    tb, T_pad, B_pad, nb = _choose_tiles(
        B, T, D, itemsize, target_rows=target_rows,
        vmem_budget_bytes=vmem_budget_bytes)

    # Pad batch / sequence up to tile boundaries (sliced off afterwards).
    xp = x
    if B_pad != B or T_pad != T:
        xp = jnp.pad(x, ((0, B_pad - B), (0, T_pad - T), (0, 0)))

    # Keep weights in the input dtype so bf16 inputs stay bf16 into the MXU.
    w1_c = w1.astype(x.dtype)
    b1_2d = b1.reshape(1, H).astype(x.dtype)
    w2_row = w2.reshape(1, H).astype(x.dtype)         # (H, 1) column -> (1, H) row

    t_chunk = min(T_pad, 256)
    kernel = functools.partial(attention_kernel, t_valid=T, t_chunk=t_chunk)

    # Advisory cost estimate for XLA's scheduler.
    flops = 2 * B_pad * T_pad * (D * H + H + D)
    transcendentals = B_pad * T_pad * (H + 1)          # tanh + exp
    bytes_accessed = (xp.size * itemsize
                      + (w1.size + b1.size + w2.size) * itemsize
                      + B_pad * D * itemsize + B_pad * T_pad * itemsize)
    cost = pl.CostEstimate(flops=flops, transcendentals=transcendentals,
                           bytes_accessed=bytes_accessed)

    # Per-step VMEM: double-buffered x block + weights + double-buffered
    # outputs + f32 temporaries (h, logits, weighted-sum chunk).
    step_bytes = (2 * tb * T_pad * D * itemsize
                  + D * H * itemsize + 2 * H * itemsize
                  + 2 * tb * D * itemsize + 2 * tb * T_pad * itemsize
                  + tb * T_pad * (H + 2) * 4 + tb * t_chunk * D * 4)
    vmem_limit = int(min(100 << 20, max(32 << 20, 2 * step_bytes)))

    out2, score2 = pl.pallas_call(
        kernel,
        out_shape=(
            jax.ShapeDtypeStruct((B_pad, D), x.dtype),
            jax.ShapeDtypeStruct((B_pad, T_pad), x.dtype),
        ),
        grid_spec=pltpu.PrefetchScalarGridSpec(
            num_scalar_prefetch=0,
            grid=(nb,),
            in_specs=[
                pl.BlockSpec((tb, T_pad, D), lambda b: (b, 0, 0)),  # x block
                pl.BlockSpec((D, H), lambda b: (0, 0)),             # W1 (resident)
                pl.BlockSpec((1, H), lambda b: (0, 0)),             # b1
                pl.BlockSpec((1, H), lambda b: (0, 0)),             # W2^T row
            ],
            out_specs=[
                pl.BlockSpec((tb, D), lambda b: (b, 0)),             # out (dense)
                pl.BlockSpec((tb, T_pad), lambda b: (b, 0)),         # score (dense)
            ],
        ),
        compiler_params=pltpu.CompilerParams(
            dimension_semantics=("parallel",),
            vmem_limit_bytes=vmem_limit,
        ),
        cost_estimate=cost,
    )(xp, w1_c, b1_2d, w2_row)

    out = out2[:B]
    score = score2[:B, :T].reshape(B, T, 1)            # back to torch shape
    return out, score


def reference_forward(x, w1, b1, w2):
    # Pure-JAX reference mirroring the PyTorch module.
    h = jnp.tanh(jnp.einsum("btd,dh->bth", x, w1) + b1)
    s = jnp.einsum("bth,ho->bto", h, w2)               # (B, T, 1)
    score = jax.nn.softmax(s, axis=1)
    out = jnp.sum(score * x, axis=1)                   # (B, D)
    return out, score


if __name__ == "__main__":
    # cfg = [D, H]; small shapes exercising the batched (tb = 8) path.
    B, T, D, H = 8, 8, 32, 32

    key = jax.random.PRNGKey(0)
    kx, kw1, kb1, kw2 = jax.random.split(key, 4)

    x = jax.random.normal(kx, (B, T, D), dtype=jnp.float32)
    w1 = jax.random.normal(kw1, (D, H), dtype=jnp.float32) * 0.1
    b1 = jax.random.normal(kb1, (H,), dtype=jnp.float32) * 0.1
    w2 = jax.random.normal(kw2, (H, 1), dtype=jnp.float32) * 0.1

    out, score = attention_forward(x, w1, b1, w2)
    out = jax.block_until_ready(out)
    score = jax.block_until_ready(score)

    out_ref, score_ref = reference_forward(x, w1, b1, w2)
    assert out.shape == (B, D) and score.shape == (B, T, 1)
    assert jnp.allclose(out, out_ref, atol=1e-4, rtol=1e-4)
    assert jnp.allclose(score, score_ref, atol=1e-4, rtol=1e-4)

    print("KERNEL_OK")
</pallas_src>

<mosaic_0001>
module attributes {stable_mosaic.version = 11 : i64} {
  func.func @attention_kernel(%arg0: i32, %arg1: memref<8x8x32xf32, #tpu.memory_space<vmem>>, %arg2: memref<32x32xf32, #tpu.memory_space<vmem>>, %arg3: memref<1x32xf32, #tpu.memory_space<vmem>>, %arg4: memref<1x32xf32, #tpu.memory_space<vmem>>, %arg5: memref<8x32xf32, #tpu.memory_space<vmem>>, %arg6: memref<8x8xf32, #tpu.memory_space<vmem>>) attributes {dimension_semantics = [#tpu.dimension_semantics<parallel>], iteration_bounds = array<i64: 1>, scalar_prefetch = 0 : i64, scratch_operands = 0 : i64, tpu.core_type = #tpu.core_type<tc>, window_params = [{transform_indices = @transform_0, window_bounds = array<i64: 8, 8, 32>}, {pipeline_mode = #tpu.pipeline_mode<synchronous>, transform_indices = @transform_1, window_bounds = array<i64: 32, 32>}, {pipeline_mode = #tpu.pipeline_mode<synchronous>, transform_indices = @transform_2, window_bounds = array<i64: 1, 32>}, {pipeline_mode = #tpu.pipeline_mode<synchronous>, transform_indices = @transform_3, window_bounds = array<i64: 1, 32>}, {transform_indices = @transform_4, window_bounds = array<i64: 8, 32>}, {transform_indices = @transform_5, window_bounds = array<i64: 8, 8>}]} {
    %c0 = arith.constant 0 : index
    %c0_0 = arith.constant 0 : index
    %c0_1 = arith.constant 0 : index
    %0 = vector.load %arg1[%c0, %c0_0, %c0_1] : memref<8x8x32xf32, #tpu.memory_space<vmem>>, vector<8x8x32xf32>
    %1 = vector.shape_cast %0 : vector<8x8x32xf32> to vector<64x32xf32>
    %c0_2 = arith.constant 0 : index
    %c0_3 = arith.constant 0 : index
    %2 = vector.load %arg2[%c0_2, %c0_3] : memref<32x32xf32, #tpu.memory_space<vmem>>, vector<32x32xf32>
    %cst = arith.constant dense<0.000000e+00> : vector<64x32xf32>
    %3 = tpu.matmul %1, %2, %cst {dimension_numbers = #tpu.dot_dimension_numbers<[1], [0], [0], [1], [0, 0, 1, 1], [], []>} : vector<64x32xf32>, vector<32x32xf32>, vector<64x32xf32> -> vector<64x32xf32>
    %c0_4 = arith.constant 0 : index
    %c0_5 = arith.constant 0 : index
    %4 = vector.load %arg3[%c0_4, %c0_5] : memref<1x32xf32, #tpu.memory_space<vmem>>, vector<1x32xf32>
    %5 = vector.broadcast %4 : vector<1x32xf32> to vector<64x32xf32>
    %6 = arith.addf %3, %5 : vector<64x32xf32>
    %7 = math.tanh %6 : vector<64x32xf32>
    %8 = vector.shape_cast %7 : vector<64x32xf32> to vector<8x8x32xf32>
    %c0_6 = arith.constant 0 : index
    %c0_7 = arith.constant 0 : index
    %9 = vector.load %arg4[%c0_6, %c0_7] : memref<1x32xf32, #tpu.memory_space<vmem>>, vector<1x32xf32>
    %10 = vector.shape_cast %9 : vector<1x32xf32> to vector<1x1x32xf32>
    %11 = vector.broadcast %10 : vector<1x1x32xf32> to vector<8x8x32xf32>
    %12 = arith.mulf %8, %11 : vector<8x8x32xf32>
    %cst_8 = arith.constant dense<0.000000e+00> : vector<8x8xf32>
    %13 = vector.multi_reduction <add>, %12, %cst_8 [2] : vector<8x8x32xf32> to vector<8x8xf32>
    %cst_9 = arith.constant dense<0xFF800000> : vector<8xf32>
    %14 = vector.multi_reduction <maximumf>, %13, %cst_9 [1] : vector<8x8xf32> to vector<8xf32>
    %15 = vector.shape_cast %14 : vector<8xf32> to vector<8x1xf32>
    %16 = vector.broadcast %15 : vector<8x1xf32> to vector<8x8xf32>
    %17 = arith.subf %13, %16 : vector<8x8xf32>
    %18 = math.exp %17 : vector<8x8xf32>
    %cst_10 = arith.constant dense<0.000000e+00> : vector<8xf32>
    %19 = vector.multi_reduction <add>, %18, %cst_10 [1] : vector<8x8xf32> to vector<8xf32>
    %20 = vector.shape_cast %19 : vector<8xf32> to vector<8x1xf32>
    %21 = vector.broadcast %20 : vector<8x1xf32> to vector<8x8xf32>
    %22 = arith.divf %18, %21 : vector<8x8xf32>
    %c0_11 = arith.constant 0 : index
    %c0_12 = arith.constant 0 : index
    %23 = vector.load %arg6[%c0_11, %c0_12] : memref<8x8xf32, #tpu.memory_space<vmem>>, vector<8x8xf32>
    tpu.vector_store %arg6[%c0_11, %c0_12], %22 {strides = array<i32>} : memref<8x8xf32, #tpu.memory_space<vmem>>, vector<8x8xf32>,
    %cst_13 = arith.constant 0.000000e+00 : f32
    %24 = vector.broadcast %cst_13 : f32 to vector<8x32xf32>
    %25 = vector.shape_cast %22 : vector<8x8xf32> to vector<8x8x1xf32>
    %26 = vector.broadcast %25 : vector<8x8x1xf32> to vector<8x8x32xf32>
    %27 = arith.mulf %26, %0 : vector<8x8x32xf32>
    %cst_14 = arith.constant dense<0.000000e+00> : vector<8x32xf32>
    %28 = vector.multi_reduction <add>, %27, %cst_14 [1] : vector<8x8x32xf32> to vector<8x32xf32>
    %29 = arith.addf %24, %28 : vector<8x32xf32>
    %c0_15 = arith.constant 0 : index
    %c0_16 = arith.constant 0 : index
    %30 = vector.load %arg5[%c0_15, %c0_16] : memref<8x32xf32, #tpu.memory_space<vmem>>, vector<8x32xf32>
    tpu.vector_store %arg5[%c0_15, %c0_16], %29 {strides = array<i32>} : memref<8x32xf32, #tpu.memory_space<vmem>>, vector<8x32xf32>,
    return
  }
  func.func @transform_0(%arg0: i32) -> (i32, i32, i32) {
    %c0_i32 = arith.constant 0 : i32
    %c0_i32_0 = arith.constant 0 : i32
    %c0_i32_1 = arith.constant 0 : i32
    return %arg0, %c0_i32, %c0_i32_0 : i32, i32, i32
  }
  func.func @transform_1(%arg0: i32) -> (i32, i32) {
    %c0_i32 = arith.constant 0 : i32
    %c0_i32_0 = arith.constant 0 : i32
    %c0_i32_1 = arith.constant 0 : i32
    return %c0_i32, %c0_i32_0 : i32, i32
  }
  func.func @transform_2(%arg0: i32) -> (i32, i32) {
    %c0_i32 = arith.constant 0 : i32
    %c0_i32_0 = arith.constant 0 : i32
    %c0_i32_1 = arith.constant 0 : i32
    return %c0_i32, %c0_i32_0 : i32, i32
  }
  func.func @transform_3(%arg0: i32) -> (i32, i32) {
    %c0_i32 = arith.constant 0 : i32
    %c0_i32_0 = arith.constant 0 : i32
    %c0_i32_1 = arith.constant 0 : i32
    return %c0_i32, %c0_i32_0 : i32, i32
  }
  func.func @transform_4(%arg0: i32) -> (i32, i32) {
    %c0_i32 = arith.constant 0 : i32
    %c0_i32_0 = arith.constant 0 : i32
    return %arg0, %c0_i32 : i32, i32
  }
  func.func @transform_5(%arg0: i32) -> (i32, i32) {
    %c0_i32 = arith.constant 0 : i32
    %c0_i32_0 = arith.constant 0 : i32
    return %arg0, %c0_i32 : i32, i32
  }
}

</mosaic_0001>

<llo_original>
// kernel: tpu_custom_call.1
$region0: #{tpu_custom_call.1}
  #allocation0 [shape = 'u32[]', space=smem, size = 0x4, offset = 0x4, fixed_abs, tag = 'smem constant byte address 0x4 - core index']
  #allocation1 [shape = 'u32[72,128]{1,0:T(1,128)}', space=vmem, size = 0x9000, scoped, tag = 'internal scratch']
  %s0 = inlined_call_operand.hbm [shape: f32[8,8,32], index: 0, kind: input, shape index: {}]
  %s1 = inlined_call_operand.hbm [shape: f32[32,32], index: 1, kind: input, shape index: {}]
  %s2 = inlined_call_operand.vmem [shape: f32[1,32], index: 2, kind: input, shape index: {}]
  %s3 = inlined_call_operand.vmem [shape: f32[1,32], index: 3, kind: input, shape index: {}]
  %s4 = inlined_call_operand.hbm [shape: f32[8,32], index: 4, kind: output, shape index: {0}]
  %s5 = inlined_call_operand.hbm [shape: f32[8,8], index: 5, kind: output, shape index: {1}]
  %6 = xla_tuple %s4, %s5
  %s7 = sld [smem:[#allocation0]]
  $region42: #{tpu_custom_call.1} parent=0
    _
  %s9 = ssub.s32 1, %s7
  %s10 = scalar_select 0, %s9, %s7
  $region1: #{tpu_custom_call.1} parent=0
    #allocation2 [shape = 'u8[32768]{0}', space=vmem, size = 0x8000, scoped, tag = 'input window, operand 0, single buffered']
    #allocation3 [shape = 's32[1]{0}', space=sflag, size = 0x4, scoped, tag = 'scoped memory for tpu_custom_call.1']
    #allocation4 [shape = 's32[1]{0}', space=sflag, size = 0x4, scoped, tag = 'scoped memory for tpu_custom_call.1']
    #allocation5 [shape = 'u8[16384]{0}', space=vmem, size = 0x4000, scoped, tag = 'input window, operand 1, single buffered']
    #allocation6 [shape = 's32[1]{0}', space=sflag, size = 0x4, scoped, tag = 'scoped memory for tpu_custom_call.1']
    #allocation7 [shape = 'u8[4096]{0}', space=vmem, size = 0x1000, scoped, tag = 'output window, operand 0, single buffered']
    #allocation8 [shape = 'u8[4096]{0}', space=vmem, size = 0x1000, scoped, tag = 'output window, operand 1, single buffered']
    #allocation9 [shape = 's32[1]{0}', space=sflag, size = 0x4, scoped, tag = 'scoped memory for tpu_custom_call.1']
    %11 = vsyncpa [#allocation3], 0
    %12 = vsyncpa [#allocation6], 0
    %13 = vsyncpa [#allocation4], 0
    %14 = vsyncpa [#allocation9], 0
    // Predicated region
    $region2: #{tpu_custom_call.1} parent=1 // pred_check
      _
    $region3: #{tpu_custom_call.1} parent=1 // pred_check_branch
      %16 = sbr.rel (0) target = $region5
    $region4: #{tpu_custom_call.1} parent=1 // pred_region
      %18 = vsyncadd [#allocation3], 0
      %s19 = sshll.u32 %s0, 4
      %s20 = int_to_ptr.hbm [resolvable:$true] %s19
      %s21 = sshll.u32 [#allocation2], 4
      %s22 = int_to_ptr.vmem [resolvable:$true] %s21
      %27 = dma.hbm_to_vmem [thread:$0]  %s20, 1024, %s22, [#allocation3], 128, 128, 8
    $region5: #{tpu_custom_call.1} parent=1 // pred_fallthru
      _
    // Predicated region
    $region6: #{tpu_custom_call.1} parent=1 // pred_check
      _
    $region7: #{tpu_custom_call.1} parent=1 // pred_check_branch
      %29 = sbr.rel (0) target = $region9
    $region8: #{tpu_custom_call.1} parent=1 // pred_region
      %31 = vsyncadd [#allocation6], 0
      %s32 = sshll.u32 %s1, 4
      %s33 = int_to_ptr.hbm [resolvable:$true] %s32
      %s34 = sshll.u32 [#allocation5], 4
      %s35 = int_to_ptr.vmem [resolvable:$true] %s34
      %40 = dma.hbm_to_vmem [thread:$0]  %s33, 512, %s35, [#allocation6], 128, 128, 8
    $region9: #{tpu_custom_call.1} parent=1 // pred_fallthru
      _
    // Predicated region
    $region10: #{tpu_custom_call.1} parent=1 // pred_check
      _
    $region11: #{tpu_custom_call.1} parent=1 // pred_check_branch
      %42 = sbr.rel (0) target = $region13
    $region12: #{tpu_custom_call.1} parent=1 // pred_region
      _
    $region13: #{tpu_custom_call.1} parent=1 // pred_fallthru
      _
    // Predicated region
    $region14: #{tpu_custom_call.1} parent=1 // pred_check
      _
    $region15: #{tpu_custom_call.1} parent=1 // pred_check_branch
      %44 = sbr.rel (0) target = $region17
    $region16: #{tpu_custom_call.1} parent=1 // pred_region
      _
    $region17: #{tpu_custom_call.1} parent=1 // pred_fallthru
      _
    // Predicated region
    $region18: #{tpu_custom_call.1} parent=1 // pred_check
      _
    $region19: #{tpu_custom_call.1} parent=1 // pred_check_branch
      %46 = sbr.rel (0) target = $region21
    $region20: #{tpu_custom_call.1} parent=1 // pred_region
      %48 = dma.done [#allocation3], 1024
    $region21: #{tpu_custom_call.1} parent=1 // pred_fallthru
      _
    // Predicated region
    $region22: #{tpu_custom_call.1} parent=1 // pred_check
      _
    $region23: #{tpu_custom_call.1} parent=1 // pred_check_branch
      %50 = sbr.rel (0) target = $region25
    $region24: #{tpu_custom_call.1} parent=1 // pred_region
      %52 = dma.done [#allocation6], 512
    $region25: #{tpu_custom_call.1} parent=1 // pred_fallthru
      _
    %v53 = vld [vmem:[#allocation2] sm:$0xff]
    %v54 = vld [vmem:[#allocation2 + $0x8] sm:$0xff]
    %v55 = vld [vmem:[#allocation2 + $0x10] sm:$0xff]
    %v56 = vld [vmem:[#allocation2 + $0x18] sm:$0xff]
    %v57 = vld [vmem:[#allocation2 + $0x20] sm:$0xff]
    %v58 = vld [vmem:[#allocation2 + $0x28] sm:$0xff]
    %v59 = vld [vmem:[#allocation2 + $0x30] sm:$0xff]
    %v60 = vld [vmem:[#allocation2 + $0x38] sm:$0xff]
    %v61 = vld [vmem:[#allocation5] sm:$0xff]
    %v62 = vld [vmem:[#allocation5 + $0x8] sm:$0xff]
    %v63 = vld [vmem:[#allocation5 + $0x10] sm:$0xff]
    %v64 = vld [vmem:[#allocation5 + $0x18] sm:$0xff]
    %v65 = vld [vmem:[%s2] sm:$0x1]
    %v67 = vperm.slane %v65, 0
    %vm69 = vcmask 261120
    %v71 = vsel %vm69, %v53, 0
    %v74 = vsel %vm69, %v54, 0
    %v77 = vsel %vm69, %v55, 0
    %v80 = vsel %vm69, %v56, 0
    %v83 = vsel %vm69, %v57, 0
    %v86 = vsel %vm69, %v58, 0
    %v89 = vsel %vm69, %v59, 0
    %v92 = vsel %vm69, %v60, 0
    %94 = vmatpush.msra.mxu0 0.0
    %95 = vmatpush.msra.mxu0 0.0
    %96 = vmatpush.msra.mxu0 0.0
    %97 = vmatpush.msra.mxu0 0.0
    %98 = vmatpush.msra.mxu0 0.0
    %99 = vmatpush.msra.mxu0 0.0
    %100 = vmatpush.msra.mxu0 0.0
    %101 = vmatpush.msra.mxu0 0.0
    %102 = vmatpush.msra.mxu0 0.0
    %103 = vmatpush.msra.mxu0 0.0
    %104 = vmatpush.msra.mxu0 0.0
    %105 = vmatpush.msra.mxu0 0.0
    %106 = vmatpush.msra.mxu0 %v64
    %107 = vmatpush.msra.mxu0 %v63
    %108 = vmatpush.msra.mxu0 %v62
    %109 = vmatpush.msra.mxu0 %v61
    %110 = vmatmul.f32.gmra.mxu0 %v71
    %v111 = vpop.f32.mrf.mxu0
    %v112 = vadd.f32 %v67, %v111
    %113 = vmatmul.f32.gmra.mxu0 %v74
    %v114 = vpop.f32.mrf.mxu0
    %v115 = vadd.f32 %v67, %v114
    %116 = vmatmul.f32.gmra.mxu0 %v77
    %v117 = vpop.f32.mrf.mxu0
    %v118 = vadd.f32 %v67, %v117
    %119 = vmatmul.f32.gmra.mxu0 %v80
    %v120 = vpop.f32.mrf.mxu0
    %v121 = vadd.f32 %v67, %v120
    %122 = vmatmul.f32.gmra.mxu0 %v83
    %v123 = vpop.f32.mrf.mxu0
    %v124 = vadd.f32 %v67, %v123
    %125 = vmatmul.f32.gmra.mxu0 %v86
    %v126 = vpop.f32.mrf.mxu0
    %v127 = vadd.f32 %v67, %v126
    %128 = vmatmul.f32.gmra.mxu0 %v89
    %v129 = vpop.f32.mrf.mxu0
    %v130 = vadd.f32 %v67, %v129
    %131 = vmatmul.f32.gmra.mxu0 %v92
    %v132 = vpop.f32.mrf.mxu0
    %v133 = vadd.f32 %v67, %v132
    %134 = vdwg.mxu0
    %v135 = vtanh.pop %v112
    %v136 = vtanh.pop %v115
    %v137 = vtanh.pop %v118
    %v138 = vtanh.pop %v121
    %v139 = vtanh.pop %v124
    %v140 = vtanh.pop %v127
    %v141 = vtanh.pop %v130
    %v142 = vtanh.pop %v133
    %v143 = vld [vmem:[%s3] sm:$0x1]
    %v145 = vperm.slane %v143, 0
    %v147 = vmul.f32 %v135, %v145
    %v148 = vmul.f32 %v136, %v145
    %v149 = vmul.f32 %v137, %v145
    %v150 = vmul.f32 %v138, %v145
    %v151 = vmul.f32 %v139, %v145
    %v152 = vmul.f32 %v140, %v145
    %v153 = vmul.f32 %v141, %v145
    %v154 = vmul.f32 %v142, %v145
    %v155 = vsel %vm69, %v147, 0.0
    %156 = vadd.xlane.f32.xlu0 %v155
    %v157 = vpop.xlane.xlu0 %156
    %v158 = vsel %vm69, %v148, 0.0
    %159 = vadd.xlane.f32.xlu0 %v158
    %v160 = vpop.xlane.xlu0 %159
    %v161 = vsel %vm69, %v149, 0.0
    %162 = vadd.xlane.f32.xlu0 %v161
    %v163 = vpop.xlane.xlu0 %162
    %v164 = vsel %vm69, %v150, 0.0
    %165 = vadd.xlane.f32.xlu0 %v164
    %v166 = vpop.xlane.xlu0 %165
    %v167 = vsel %vm69, %v151, 0.0
    %168 = vadd.xlane.f32.xlu0 %v167
    %v169 = vpop.xlane.xlu0 %168
    %v170 = vsel %vm69, %v152, 0.0
    %171 = vadd.xlane.f32.xlu0 %v170
    %v172 = vpop.xlane.xlu0 %171
    %v173 = vsel %vm69, %v153, 0.0
    %174 = vadd.xlane.f32.xlu0 %v173
    %v175 = vpop.xlane.xlu0 %174
    %v176 = vsel %vm69, %v154, 0.0
    %177 = vadd.xlane.f32.xlu0 %v176
    %v178 = vpop.xlane.xlu0 %177
    %v187 = vlaneseq
    %v188 = vand.u32 %v187, 127
    %v189 = vperm.slane %v157, %v188
    %v190 = vperm.slane %v160, %v188
    %v191 = vperm.slane %v163, %v188
    %v192 = vperm.slane %v166, %v188
    %v193 = vperm.slane %v169, %v188
    %v194 = vperm.slane %v172, %v188
    %v195 = vperm.slane %v175, %v188
    %v196 = vperm.slane %v178, %v188
    %vm197 = vcmask 1041409
    %v198 = vsel %vm197, %v190, %v189
    %vm199 = vcmask 1042434
    %v200 = vsel %vm199, %v191, %v198
    %vm201 = vcmask 1043459
    %v202 = vsel %vm201, %v192, %v200
    %vm203 = vcmask 1044484
    %v204 = vsel %vm203, %v193, %v202
    %vm205 = vcmask 1045509
    %v206 = vsel %vm205, %v194, %v204
    %vm207 = vcmask 1046534
    %v208 = vsel %vm207, %v195, %v206
    %vm209 = vcmask 1047559
    %v210 = vsel %vm209, %v196, %v208
    %vm212 = vcmask 64512
    %v213 = vsel %vm212, %v210, -inf
    %214 = vmax.xlane.f32.xlu0 %v213
    %v215 = vpop.xlane.xlu0 %214
    %v217 = vperm.slane %v215, 0
    %v218 = vperm.slane %v215, 1
    %v219 = vperm.slane %v215, 2
    %v220 = vperm.slane %v215, 3
    %v221 = vperm.slane %v215, 4
    %v222 = vperm.slane %v215, 5
    %v223 = vperm.slane %v215, 6
    %v224 = vperm.slane %v215, 7
    %v233 = vsub.f32 %v157, %v217
    %v234 = vsub.f32 %v160, %v218
    %v235 = vsub.f32 %v163, %v219
    %v236 = vsub.f32 %v166, %v220
    %v237 = vsub.f32 %v169, %v221
    %v238 = vsub.f32 %v172, %v222
    %v239 = vsub.f32 %v175, %v223
    %v240 = vsub.f32 %v178, %v224
    %v241 = vmul.f32 %v233, 1.442695
    %v242 = vpow.pop %v241
    %v243 = vmul.f32 %v234, 1.442695
    %v244 = vpow.pop %v243
    %v245 = vmul.f32 %v235, 1.442695
    %v246 = vpow.pop %v245
    %v247 = vmul.f32 %v236, 1.442695
    %v248 = vpow.pop %v247
    %v249 = vmul.f32 %v237, 1.442695
    %v250 = vpow.pop %v249
    %v251 = vmul.f32 %v238, 1.442695
    %v252 = vpow.pop %v251
    %v253 = vmul.f32 %v239, 1.442695
    %v254 = vpow.pop %v253
    %v255 = vmul.f32 %v240, 1.442695
    %v256 = vpow.pop %v255
    %265 = vset.pattern.permute.xlu0 0
    %266 = vperm.xlu0 %265, %v242
    %v267 = vpop.permute.xlu0 %266
    %268 = vset.pattern.permute.xlu0 0
    %269 = vperm.xlu0 %268, %v244
    %v270 = vpop.permute.xlu0 %269
    %271 = vset.pattern.permute.xlu0 0
    %272 = vperm.xlu0 %271, %v246
    %v273 = vpop.permute.xlu0 %272
    %274 = vset.pattern.permute.xlu0 0
    %275 = vperm.xlu0 %274, %v248
    %v276 = vpop.permute.xlu0 %275
    %277 = vset.pattern.permute.xlu0 0
    %278 = vperm.xlu0 %277, %v250
    %v279 = vpop.permute.xlu0 %278
    %280 = vset.pattern.permute.xlu0 0
    %281 = vperm.xlu0 %280, %v252
    %v282 = vpop.permute.xlu0 %281
    %283 = vset.pattern.permute.xlu0 0
    %284 = vperm.xlu0 %283, %v254
    %v285 = vpop.permute.xlu0 %284
    %286 = vset.pattern.permute.xlu0 0
    %287 = vperm.xlu0 %286, %v256
    %v288 = vpop.permute.xlu0 %287
    %v289 = vperm.slane %v267, %v188
    %v290 = vperm.slane %v270, %v188
    %v291 = vperm.slane %v273, %v188
    %v292 = vperm.slane %v276, %v188
    %v293 = vperm.slane %v279, %v188
    %v294 = vperm.slane %v282, %v188
    %v295 = vperm.slane %v285, %v188
    %v296 = vperm.slane %v288, %v188
    %v297 = vsel %vm197, %v290, %v289
    %v298 = vsel %vm199, %v291, %v297
    %v299 = vsel %vm201, %v292, %v298
    %v300 = vsel %vm203, %v293, %v299
    %v301 = vsel %vm205, %v294, %v300
    %v302 = vsel %vm207, %v295, %v301
    %v303 = vsel %vm209, %v296, %v302
    %v305 = vsel %vm212, %v303, 0.0
    %306 = vadd.xlane.f32.xlu0 %v305
    %v307 = vpop.xlane.xlu0 %306
    %v309 = vperm.slane %v307, 0
    %v310 = vperm.slane %v307, 1
    %v311 = vperm.slane %v307, 2
    %v312 = vperm.slane %v307, 3
    %v313 = vperm.slane %v307, 4
    %v314 = vperm.slane %v307, 5
    %v315 = vperm.slane %v307, 6
    %v316 = vperm.slane %v307, 7
    %v325 = vrcp.pop %v309
    %v326 = vmul.f32 %v309, %v325
    %v327 = vsub.f32 1.0, %v326
    %v328 = vmul.f32 %v325, %v327
    %v329 = vadd.f32 %v325, %v328
    %vm330 = vweird.f32 %v309
    %vm331 = vweird.f32 %v325
    %vm332 = vmor %vm330, %vm331
    %v333 = vsel %vm332, %v325, %v329
    %v334 = vand.u32 2147483647, %v309
    %vm335 = vcmp.eq.f32.partialorder %v334, 8.507059e+37
    %v336 = vand.u32 %v309, 2147483648
    %v337 = vor.u32 1.1754944e-38, %v336
    %v338 = vsel %vm335, %v337, %v333
    %v339 = vmul.f32 %v242, %v338
    %v340 = vrcp.pop %v310
    %v341 = vmul.f32 %v310, %v340
    %v342 = vsub.f32 1.0, %v341
    %v343 = vmul.f32 %v340, %v342
    %v344 = vadd.f32 %v340, %v343
    %vm345 = vweird.f32 %v310
    %vm346 = vweird.f32 %v340
    %vm347 = vmor %vm345, %vm346
    %v348 = vsel %vm347, %v340, %v344
    %v349 = vand.u32 2147483647, %v310
    %vm350 = vcmp.eq.f32.partialorder %v349, 8.507059e+37
    %v351 = vand.u32 %v310, 2147483648
    %v352 = vor.u32 1.1754944e-38, %v351
    %v353 = vsel %vm350, %v352, %v348
    %v354 = vmul.f32 %v244, %v353
    %v355 = vrcp.pop %v311
    %v356 = vmul.f32 %v311, %v355
    %v357 = vsub.f32 1.0, %v356
    %v358 = vmul.f32 %v355, %v357
    %v359 = vadd.f32 %v355, %v358
    %vm360 = vweird.f32 %v311
    %vm361 = vweird.f32 %v355
    %vm362 = vmor %vm360, %vm361
    %v363 = vsel %vm362, %v355, %v359
    %v364 = vand.u32 2147483647, %v311
    %vm365 = vcmp.eq.f32.partialorder %v364, 8.507059e+37
    %v366 = vand.u32 %v311, 2147483648
    %v367 = vor.u32 1.1754944e-38, %v366
    %v368 = vsel %vm365, %v367, %v363
    %v369 = vmul.f32 %v246, %v368
    %v370 = vrcp.pop %v312
    %v371 = vmul.f32 %v312, %v370
    %v372 = vsub.f32 1.0, %v371
    %v373 = vmul.f32 %v370, %v372
    %v374 = vadd.f32 %v370, %v373
    %vm375 = vweird.f32 %v312
    %vm376 = vweird.f32 %v370
    %vm377 = vmor %vm375, %vm376
    %v378 = vsel %vm377, %v370, %v374
    %v379 = vand.u32 2147483647, %v312
    %vm380 = vcmp.eq.f32.partialorder %v379, 8.507059e+37
    %v381 = vand.u32 %v312, 2147483648
    %v382 = vor.u32 1.1754944e-38, %v381
    %v383 = vsel %vm380, %v382, %v378
    %v384 = vmul.f32 %v248, %v383
    %v385 = vrcp.pop %v313
    %v386 = vmul.f32 %v313, %v385
    %v387 = vsub.f32 1.0, %v386
    %v388 = vmul.f32 %v385, %v387
    %v389 = vadd.f32 %v385, %v388
    %vm390 = vweird.f32 %v313
    %vm391 = vweird.f32 %v385
    %vm392 = vmor %vm390, %vm391
    %v393 = vsel %vm392, %v385, %v389
    %v394 = vand.u32 2147483647, %v313
    %vm395 = vcmp.eq.f32.partialorder %v394, 8.507059e+37
    %v396 = vand.u32 %v313, 2147483648
    %v397 = vor.u32 1.1754944e-38, %v396
    %v398 = vsel %vm395, %v397, %v393
    %v399 = vmul.f32 %v250, %v398
    %v400 = vrcp.pop %v314
    %v401 = vmul.f32 %v314, %v400
    %v402 = vsub.f32 1.0, %v401
    %v403 = vmul.f32 %v400, %v402
    %v404 = vadd.f32 %v400, %v403
    %vm405 = vweird.f32 %v314
    %vm406 = vweird.f32 %v400
    %vm407 = vmor %vm405, %vm406
    %v408 = vsel %vm407, %v400, %v404
    %v409 = vand.u32 2147483647, %v314
    %vm410 = vcmp.eq.f32.partialorder %v409, 8.507059e+37
    %v411 = vand.u32 %v314, 2147483648
    %v412 = vor.u32 1.1754944e-38, %v411
    %v413 = vsel %vm410, %v412, %v408
    %v414 = vmul.f32 %v252, %v413
    %v415 = vrcp.pop %v315
    %v416 = vmul.f32 %v315, %v415
    %v417 = vsub.f32 1.0, %v416
    %v418 = vmul.f32 %v415, %v417
    %v419 = vadd.f32 %v415, %v418
    %vm420 = vweird.f32 %v315
    %vm421 = vweird.f32 %v415
    %vm422 = vmor %vm420, %vm421
    %v423 = vsel %vm422, %v415, %v419
    %v424 = vand.u32 2147483647, %v315
    %vm425 = vcmp.eq.f32.partialorder %v424, 8.507059e+37
    %v426 = vand.u32 %v315, 2147483648
    %v427 = vor.u32 1.1754944e-38, %v426
    %v428 = vsel %vm425, %v427, %v423
    %v429 = vmul.f32 %v254, %v428
    %v430 = vrcp.pop %v316
    %v431 = vmul.f32 %v316, %v430
    %v432 = vsub.f32 1.0, %v431
    %v433 = vmul.f32 %v430, %v432
    %v434 = vadd.f32 %v430, %v433
    %vm435 = vweird.f32 %v316
    %vm436 = vweird.f32 %v430
    %vm437 = vmor %vm435, %vm436
    %v438 = vsel %vm437, %v430, %v434
    %v439 = vand.u32 2147483647, %v316
    %vm440 = vcmp.eq.f32.partialorder %v439, 8.507059e+37
    %v441 = vand.u32 %v316, 2147483648
    %v442 = vor.u32 1.1754944e-38, %v441
    %v443 = vsel %vm440, %v442, %v438
    %v444 = vmul.f32 %v256, %v443
    %453 = vset.pattern.permute.xlu0 0
    %454 = vperm.xlu0 %453, %v339
    %v455 = vpop.permute.xlu0 %454
    %456 = vset.pattern.permute.xlu0 0
    %457 = vperm.xlu0 %456, %v354
    %v458 = vpop.permute.xlu0 %457
    %459 = vset.pattern.permute.xlu0 0
    %460 = vperm.xlu0 %459, %v369
    %v461 = vpop.permute.xlu0 %460
    %462 = vset.pattern.permute.xlu0 0
    %463 = vperm.xlu0 %462, %v384
    %v464 = vpop.permute.xlu0 %463
    %465 = vset.pattern.permute.xlu0 0
    %466 = vperm.xlu0 %465, %v399
    %v467 = vpop.permute.xlu0 %466
    %468 = vset.pattern.permute.xlu0 0
    %469 = vperm.xlu0 %468, %v414
    %v470 = vpop.permute.xlu0 %469
    %471 = vset.pattern.permute.xlu0 0
    %472 = vperm.xlu0 %471, %v429
    %v473 = vpop.permute.xlu0 %472
    %474 = vset.pattern.permute.xlu0 0
    %475 = vperm.xlu0 %474, %v444
    %v476 = vpop.permute.xlu0 %475
    %v477 = vperm.slane %v455, %v188
    %v478 = vperm.slane %v458, %v188
    %v479 = vperm.slane %v461, %v188
    %v480 = vperm.slane %v464, %v188
    %v481 = vperm.slane %v467, %v188
    %v482 = vperm.slane %v470, %v188
    %v483 = vperm.slane %v473, %v188
    %v484 = vperm.slane %v476, %v188
    %v485 = vsel %vm197, %v478, %v477
    %v486 = vsel %vm199, %v479, %v485
    %v487 = vsel %vm201, %v480, %v486
    %v488 = vsel %vm203, %v481, %v487
    %v489 = vsel %vm205, %v482, %v488
    %v490 = vsel %vm207, %v483, %v489
    %v491 = vsel %vm209, %v484, %v490
    %493 = vst.msk [vmem:[#allocation8] sm:$0xff] %vm212, %v491
    %v502 = vmul.f32 %v455, %v53
    %v503 = vmul.f32 %v458, %v54
    %v504 = vmul.f32 %v461, %v55
    %v505 = vmul.f32 %v464, %v56
    %v506 = vmul.f32 %v467, %v57
    %v507 = vmul.f32 %v470, %v58
    %v508 = vmul.f32 %v473, %v59
    %v509 = vmul.f32 %v476, %v60
    %v510 = vsel %vm69, %v502, 0.0
    %v511 = vrot.slane %v510, 4
    %v512 = vadd.f32 %v510, %v511
    %v513 = vrot.slane %v512, 2
    %v514 = vadd.f32 %v512, %v513
    %v515 = vrot.slane %v514, 1
    %v516 = vadd.f32 %v514, %v515
    %v517 = vsel %vm69, %v503, 0.0
    %v518 = vrot.slane %v517, 4
    %v519 = vadd.f32 %v517, %v518
    %v520 = vrot.slane %v519, 2
    %v521 = vadd.f32 %v519, %v520
    %v522 = vrot.slane %v521, 1
    %v523 = vadd.f32 %v521, %v522
    %v524 = vsel %vm69, %v504, 0.0
    %v525 = vrot.slane %v524, 4
    %v526 = vadd.f32 %v524, %v525
    %v527 = vrot.slane %v526, 2
    %v528 = vadd.f32 %v526, %v527
    %v529 = vrot.slane %v528, 1
    %v530 = vadd.f32 %v528, %v529
    %v531 = vsel %vm69, %v505, 0.0
    %v532 = vrot.slane %v531, 4
    %v533 = vadd.f32 %v531, %v532
    %v534 = vrot.slane %v533, 2
    %v535 = vadd.f32 %v533, %v534
    %v536 = vrot.slane %v535, 1
    %v537 = vadd.f32 %v535, %v536
    %v538 = vsel %vm69, %v506, 0.0
    %v539 = vrot.slane %v538, 4
    %v540 = vadd.f32 %v538, %v539
    %v541 = vrot.slane %v540, 2
    %v542 = vadd.f32 %v540, %v541
    %v543 = vrot.slane %v542, 1
    %v544 = vadd.f32 %v542, %v543
    %v545 = vsel %vm69, %v507, 0.0
    %v546 = vrot.slane %v545, 4
    %v547 = vadd.f32 %v545, %v546
    %v548 = vrot.slane %v547, 2
    %v549 = vadd.f32 %v547, %v548
    %v550 = vrot.slane %v549, 1
    %v551 = vadd.f32 %v549, %v550
    %v552 = vsel %vm69, %v508, 0.0
    %v553 = vrot.slane %v552, 4
    %v554 = vadd.f32 %v552, %v553
    %v555 = vrot.slane %v554, 2
    %v556 = vadd.f32 %v554, %v555
    %v557 = vrot.slane %v556, 1
    %v558 = vadd.f32 %v556, %v557
    %v559 = vsel %vm69, %v509, 0.0
    %v560 = vrot.slane %v559, 4
    %v561 = vadd.f32 %v559, %v560
    %v562 = vrot.slane %v561, 2
    %v563 = vadd.f32 %v561, %v562
    %v564 = vrot.slane %v563, 1
    %v565 = vadd.f32 %v563, %v564
    %v566 = vadd.f32 %v516, 0.0
    %v567 = vadd.f32 %v523, 0.0
    %v568 = vadd.f32 %v530, 0.0
    %v569 = vadd.f32 %v537, 0.0
    %v570 = vadd.f32 %v544, 0.0
    %v571 = vadd.f32 %v551, 0.0
    %v572 = vadd.f32 %v558, 0.0
    %v573 = vadd.f32 %v565, 0.0
    %v582 = vsel %vm197, %v567, %v566
    %v583 = vsel %vm199, %v568, %v582
    %v584 = vsel %vm201, %v569, %v583
    %v585 = vsel %vm203, %v570, %v584
    %v586 = vsel %vm205, %v571, %v585
    %v587 = vsel %vm207, %v572, %v586
    %v588 = vsel %vm209, %v573, %v587
    %590 = vst.msk [vmem:[#allocation7] sm:$0xff] %vm69, %v588
    // Predicated region
    $region26: #{tpu_custom_call.1} parent=1 // pred_check
      _
    $region27: #{tpu_custom_call.1} parent=1 // pred_check_branch
      %592 = sbr.rel (0) target = $region29
    $region28: #{tpu_custom_call.1} parent=1 // pred_region
      %594 = vsyncadd [#allocation4], 0
      %s596 = sshll.u32 [#allocation7], 4
      %s597 = int_to_ptr.vmem [resolvable:$true] %s596
      %s598 = sshll.u32 %s4, 4
      %s599 = int_to_ptr.hbm [resolvable:$true] %s598
      %601 = dma.vmem_to_hbm [thread:$0]  %s597, 128, %s599, [#allocation4]
    $region29: #{tpu_custom_call.1} parent=1 // pred_fallthru
      _
    // Predicated region
    $region30: #{tpu_custom_call.1} parent=1 // pred_check
      _
    $region31: #{tpu_custom_call.1} parent=1 // pred_check_branch
      %603 = sbr.rel (0) target = $region33
    $region32: #{tpu_custom_call.1} parent=1 // pred_region
      %605 = vsyncadd [#allocation9], 0
      %s607 = sshll.u32 [#allocation8], 4
      %s608 = int_to_ptr.vmem [resolvable:$true] %s607
      %s609 = sshll.u32 %s5, 4
      %s610 = int_to_ptr.hbm [resolvable:$true] %s609
      %612 = dma.vmem_to_hbm [thread:$0]  %s608, 128, %s610, [#allocation9]
    $region33: #{tpu_custom_call.1} parent=1 // pred_fallthru
      _
    // Predicated region
    $region34: #{tpu_custom_call.1} parent=1 // pred_check
      _
    $region35: #{tpu_custom_call.1} parent=1 // pred_check_branch
      %614 = sbr.rel (0) target = $region37
    $region36: #{tpu_custom_call.1} parent=1 // pred_region
      %616 = dma.done [#allocation4], 128
    $region37: #{tpu_custom_call.1} parent=1 // pred_fallthru
      _
    // Predicated region
    $region38: #{tpu_custom_call.1} parent=1 // pred_check
      _
    $region39: #{tpu_custom_call.1} parent=1 // pred_check_branch
      %618 = sbr.rel (0) target = $region41
    $region40: #{tpu_custom_call.1} parent=1 // pred_region
      %620 = dma.done [#allocation9], 128
    $region41: #{tpu_custom_call.1} parent=1 // pred_fallthru
      _
    %621 = vsyncpa [#allocation3], 1
    %622 = vsyncpa [#allocation6], 1
    %623 = vsyncpa [#allocation4], 1
    %624 = vsyncpa [#allocation9], 1

</llo_original>
